<compile_context>
chip_gen: v7x
topology: tpu7x:2x2x1
jax: 0.10.0
libtpu: 0.0.40
codegen_flags: <defaults>
</compile_context>

<pallas_src>
import jax
import jax.numpy as jnp
from jax.experimental import pallas as pl
from jax.experimental.pallas import tpu as pltpu


def _round_up(x: int, m: int) -> int:
    return ((x + m - 1) // m) * m


def _make_ahd_kernel(n_true, m_true, tn, tm, inv_n, inv_m, mask_rows, mask_cols):
    def kernel(s1_ref, s2_ref, out_ref, row_min_ref, col_min_ref, t1_ref, t2_ref):
        i = pl.program_id(0)            # set1 (row) tile index, outer axis
        j = pl.program_id(1)            # set2 (col) tile index, inner axis
        n_i = pl.num_programs(0)
        n_j = pl.num_programs(1)

        # ---- init partial-sum accumulators on the very first grid step -----
        @pl.when(jnp.logical_and(i == 0, j == 0))
        def _():
            t1_ref[...] = jnp.zeros_like(t1_ref)
            t2_ref[...] = jnp.zeros_like(t2_ref)

        s1 = s1_ref[...]                                   # (tn, d)
        s2 = s2_ref[...]                                   # (tm, d)
        s1f = s1.astype(jnp.float32)
        s2f = s2.astype(jnp.float32)

        # Squared norms.  n1 lands naturally as (tn, 1); n2 is produced
        # lane-major as (1, tm) via a tiny matmul so no relayout is needed.
        n1 = jnp.sum(s1f * s1f, axis=-1, keepdims=True)    # (tn, 1)
        ones_row = jnp.ones((1, s1f.shape[-1]), jnp.float32)
        n2 = jax.lax.dot_general(                          # (1, tm)
            ones_row, s2f * s2f,
            dimension_numbers=(((1,), (1,)), ((), ())),
            preferred_element_type=jnp.float32)

        # -2 * s1 @ s2^T on the MXU with f32 accumulation (inputs fed in their
        # native dtype, e.g. bf16 goes straight to the MXU).
        prod = jax.lax.dot_general(                        # (tn, tm)
            s1, s2,
            dimension_numbers=(((1,), (1,)), ((), ())),
            preferred_element_type=jnp.float32)
        d2 = jnp.maximum(n1 + n2 - 2.0 * prod, 0.0)

        # Validity masking for padded rows / cols.  Trace-time specialized:
        # nothing is emitted when the axis divides evenly, and when masking is
        # needed a single combined select covers both the row- and col-min
        # reductions (invalid entries become +inf and are dropped later).
        row_valid = None
        col_valid = None
        valid = None
        if mask_rows:
            row_ids = i * tn + jax.lax.broadcasted_iota(jnp.int32, (tn, 1), 0)
            row_valid = row_ids < n_true                   # (tn, 1)
            valid = row_valid
        if mask_cols:
            col_ids = j * tm + jax.lax.broadcasted_iota(jnp.int32, (1, tm), 1)
            col_valid = col_ids < m_true                   # (1, tm)
            valid = col_valid if valid is None else jnp.logical_and(valid, col_valid)
        d2m = d2 if valid is None else jnp.where(valid, d2, jnp.inf)

        tile_row_min = jnp.min(d2m, axis=1, keepdims=True)   # (tn, 1)
        tile_col_min = jnp.min(d2m, axis=0, keepdims=True)   # (1, tm)

        # Running row-min (squared) across the set2 sweep (inner j axis).
        @pl.when(j == 0)
        def _():
            row_min_ref[...] = tile_row_min

        @pl.when(j > 0)
        def _():
            row_min_ref[...] = jnp.minimum(row_min_ref[...], tile_row_min)

        # Running col-min (squared) across the set1 sweep (outer i axis).
        j_off = pl.multiple_of(j * tm, tm)

        @pl.when(i == 0)
        def _():
            col_min_ref[:, pl.ds(j_off, tm)] = tile_col_min

        @pl.when(i > 0)
        def _():
            col_min_ref[:, pl.ds(j_off, tm)] = jnp.minimum(
                col_min_ref[:, pl.ds(j_off, tm)], tile_col_min)

        # term_1: this set1 tile has now seen every set2 tile -> only tn sqrts.
        @pl.when(j == n_j - 1)
        def _():
            rmin = jnp.sqrt(row_min_ref[...])
            if mask_rows:
                rmin = jnp.where(row_valid, rmin, 0.0)
            t1_ref[...] += jnp.sum(rmin, keepdims=True)

        # term_2: this set2 slice has now seen every set1 tile -> only tm sqrts.
        @pl.when(i == n_i - 1)
        def _():
            cmin = jnp.sqrt(col_min_ref[:, pl.ds(j_off, tm)])
            if mask_cols:
                cmin = jnp.where(col_valid, cmin, 0.0)
            t2_ref[...] += jnp.sum(cmin, keepdims=True)

        # Final scalar on the last grid step (true-N / true-M denominators).
        @pl.when(jnp.logical_and(i == n_i - 1, j == n_j - 1))
        def _():
            out_ref[...] = t1_ref[...] * inv_n + t2_ref[...] * inv_m

    return kernel


def averaged_hausdorff_loss(set1, set2, *, tn=512, tm=1024):
    """Pallas TPU implementation of AveragedHausdorffLoss.forward."""
    assert set1.ndim == 2, f"got {set1.ndim}"
    assert set2.ndim == 2, f"got {set2.ndim}"
    assert set1.shape[1] == set2.shape[1], (
        "The points in both sets must have the same number of dimensions, "
        f"got {set1.shape[1]} and {set2.shape[1]}."
    )
    n, d = set1.shape
    m, _ = set2.shape

    # Tile sizes: set1 rows on sublanes (multiple of 8), set2 rows on lanes
    # (multiple of 128, lane-dense inner axis).  Clamp down for small inputs;
    # defaults keep the (tn, tm) f32 distance tile at 2 MiB, comfortably inside
    # even v7x's smaller VMEM, while amortizing per-grid-step overhead.
    tn = max(8, min(tn, _round_up(n, 8)))
    tm = max(128, min(tm, _round_up(m, 128)))
    n_pad = _round_up(n, tn)
    m_pad = _round_up(m, tm)

    set1p = jnp.pad(set1, ((0, n_pad - n), (0, 0))) if n_pad != n else set1
    set2p = jnp.pad(set2, ((0, m_pad - m), (0, 0))) if m_pad != m else set2

    grid = (n_pad // tn, m_pad // tm)
    kernel = _make_ahd_kernel(
        n, m, tn, tm, 1.0 / n, 1.0 / m,
        mask_rows=(n_pad != n), mask_cols=(m_pad != m))

    out = pl.pallas_call(
        kernel,
        out_shape=jax.ShapeDtypeStruct((1, 1), jnp.float32),
        grid_spec=pltpu.PrefetchScalarGridSpec(
            num_scalar_prefetch=0,
            grid=grid,
            in_specs=[
                pl.BlockSpec((tn, d), lambda i, j: (i, 0)),
                pl.BlockSpec((tm, d), lambda i, j: (j, 0)),
            ],
            out_specs=pl.BlockSpec((1, 1), lambda i, j: (0, 0)),
            scratch_shapes=[
                pltpu.VMEM((tn, 1), jnp.float32),      # running row min (d^2)
                pltpu.VMEM((1, m_pad), jnp.float32),   # running col min (d^2)
                pltpu.VMEM((1, 1), jnp.float32),       # term_1 partial sum
                pltpu.VMEM((1, 1), jnp.float32),       # term_2 partial sum
            ],
        ),
        compiler_params=pltpu.CompilerParams(
            dimension_semantics=("arbitrary", "arbitrary")),
    )(set1p, set2p)
    return out[0, 0]


def _reference(set1, set2):
    # Pure-JAX reference mirroring the PyTorch code exactly.
    diff = set1[:, None, :] - set2[None, :, :]
    dist = jnp.sqrt(jnp.sum(diff ** 2, axis=-1))
    return jnp.mean(jnp.min(dist, axis=1)) + jnp.mean(jnp.min(dist, axis=0))


if __name__ == "__main__":
    key = jax.random.PRNGKey(0)
    k1, k2, k3, k4 = jax.random.split(key, 4)

    # Small unordered point sets (no batch dim, as the module requires).
    N, M, D = 32, 48, 8
    set1 = jax.random.normal(k1, (N, D), dtype=jnp.float32)
    set2 = jax.random.normal(k2, (M, D), dtype=jnp.float32)

    loss = jax.block_until_ready(averaged_hausdorff_loss(set1, set2))
    ref = _reference(set1, set2)
    assert jnp.allclose(loss, ref, rtol=1e-4, atol=1e-4), (loss, ref)

    # Multi-tile + padded-edge path (exercises the grid, masking and the
    # running-min accumulators with non-divisible N / M).
    N2, M2 = 150, 300
    a = jax.random.normal(k3, (N2, D), dtype=jnp.float32)
    b = jax.random.normal(k4, (M2, D), dtype=jnp.float32)
    loss2 = jax.block_until_ready(averaged_hausdorff_loss(a, b, tn=64, tm=128))
    ref2 = _reference(a, b)
    assert jnp.allclose(loss2, ref2, rtol=1e-4, atol=1e-4), (loss2, ref2)

    print("KERNEL_OK")
</pallas_src>

<mosaic_0001>
module attributes {stable_mosaic.version = 11 : i64} {
  func.func @kernel(%arg0: i32, %arg1: i32, %arg2: memref<32x8xf32, #tpu.memory_space<vmem>>, %arg3: memref<128x8xf32, #tpu.memory_space<vmem>>, %arg4: memref<1x1xf32, #tpu.memory_space<vmem>>, %arg5: memref<32x1xf32, #tpu.memory_space<vmem>>, %arg6: memref<1x128xf32, #tpu.memory_space<vmem>>, %arg7: memref<1x1xf32, #tpu.memory_space<vmem>>, %arg8: memref<1x1xf32, #tpu.memory_space<vmem>>) attributes {dimension_semantics = [#tpu.dimension_semantics<arbitrary>, #tpu.dimension_semantics<arbitrary>], iteration_bounds = array<i64: 1, 1>, scalar_prefetch = 0 : i64, scratch_operands = 4 : i64, tpu.core_type = #tpu.core_type<tc>, window_params = [{transform_indices = @transform_0, window_bounds = array<i64: 32, 8>}, {transform_indices = @transform_1, window_bounds = array<i64: 128, 8>}, {pipeline_mode = #tpu.pipeline_mode<synchronous>, transform_indices = @transform_2, window_bounds = array<i64: 1, 1>}]} {
    %c0_i32 = arith.constant 0 : i32
    %0 = arith.cmpi eq, %arg0, %c0_i32 : i32
    %c0_i32_0 = arith.constant 0 : i32
    %1 = arith.cmpi eq, %arg1, %c0_i32_0 : i32
    %2 = arith.andi %0, %1 : i1
    %3 = arith.extui %2 : i1 to i32
    %c0_i32_1 = arith.constant 0 : i32
    %4 = arith.cmpi ne, %3, %c0_i32_1 : i32
    scf.if %4 {
      %cst_29 = arith.constant 0.000000e+00 : f32
      %61 = vector.broadcast %cst_29 : f32 to vector<1x1xf32>
      %c0_30 = arith.constant 0 : index
      %c0_31 = arith.constant 0 : index
      %62 = vector.load %arg7[%c0_30, %c0_31] : memref<1x1xf32, #tpu.memory_space<vmem>>, vector<1x1xf32>
      tpu.vector_store %arg7[%c0_30, %c0_31], %61 {strides = array<i32>} : memref<1x1xf32, #tpu.memory_space<vmem>>, vector<1x1xf32>,
      %cst_32 = arith.constant 0.000000e+00 : f32
      %63 = vector.broadcast %cst_32 : f32 to vector<1x1xf32>
      %c0_33 = arith.constant 0 : index
      %c0_34 = arith.constant 0 : index
      %64 = vector.load %arg8[%c0_33, %c0_34] : memref<1x1xf32, #tpu.memory_space<vmem>>, vector<1x1xf32>
      tpu.vector_store %arg8[%c0_33, %c0_34], %63 {strides = array<i32>} : memref<1x1xf32, #tpu.memory_space<vmem>>, vector<1x1xf32>,
    } else {
    }
    %c0 = arith.constant 0 : index
    %c0_2 = arith.constant 0 : index
    %5 = vector.load %arg2[%c0, %c0_2] : memref<32x8xf32, #tpu.memory_space<vmem>>, vector<32x8xf32>
    %c0_3 = arith.constant 0 : index
    %c0_4 = arith.constant 0 : index
    %6 = vector.load %arg3[%c0_3, %c0_4] : memref<128x8xf32, #tpu.memory_space<vmem>>, vector<128x8xf32>
    %7 = arith.mulf %5, %5 : vector<32x8xf32>
    %cst = arith.constant dense<0.000000e+00> : vector<32xf32>
    %8 = vector.multi_reduction <add>, %7, %cst [1] : vector<32x8xf32> to vector<32xf32>
    %9 = vector.shape_cast %8 : vector<32xf32> to vector<32x1xf32>
    %cst_5 = arith.constant 1.000000e+00 : f32
    %10 = vector.broadcast %cst_5 : f32 to vector<1x8xf32>
    %11 = arith.mulf %6, %6 : vector<128x8xf32>
    %cst_6 = arith.constant dense<0.000000e+00> : vector<1x128xf32>
    %12 = tpu.matmul %10, %11, %cst_6 {dimension_numbers = #tpu.dot_dimension_numbers<[1], [1], [0], [0], [0, 0, 1, 0], [], []>} : vector<1x8xf32>, vector<128x8xf32>, vector<1x128xf32> -> vector<1x128xf32>
    %cst_7 = arith.constant dense<0.000000e+00> : vector<32x128xf32>
    %13 = tpu.matmul %5, %6, %cst_7 {dimension_numbers = #tpu.dot_dimension_numbers<[1], [1], [0], [0], [0, 0, 1, 0], [], []>} : vector<32x8xf32>, vector<128x8xf32>, vector<32x128xf32> -> vector<32x128xf32>
    %14 = vector.broadcast %9 : vector<32x1xf32> to vector<32x128xf32>
    %15 = vector.broadcast %12 : vector<1x128xf32> to vector<32x128xf32>
    %16 = arith.addf %14, %15 : vector<32x128xf32>
    %cst_8 = arith.constant 2.000000e+00 : f32
    %17 = vector.broadcast %cst_8 : f32 to vector<32x128xf32>
    %18 = arith.mulf %17, %13 : vector<32x128xf32>
    %19 = arith.subf %16, %18 : vector<32x128xf32>
    %cst_9 = arith.constant 0.000000e+00 : f32
    %20 = vector.broadcast %cst_9 : f32 to vector<32x128xf32>
    %21 = arith.maximumf %19, %20 : vector<32x128xf32>
    %c128_i32 = arith.constant 128 : i32
    %22 = arith.muli %arg1, %c128_i32 : i32
    %23 = tpu.iota {dimensions = array<i32: 1>} : vector<1x128xi32>
    %24 = vector.broadcast %22 : i32 to vector<1x128xi32>
    %25 = arith.addi %24, %23 : vector<1x128xi32>
    %c48_i32 = arith.constant 48 : i32
    %26 = vector.broadcast %c48_i32 : i32 to vector<1x128xi32>
    %27 = arith.cmpi slt, %25, %26 : vector<1x128xi32>
    %cst_10 = arith.constant 0x7F800000 : f32
    %28 = vector.shape_cast %27 : vector<1x128xi1> to vector<1x128xi1>
    %29 = vector.broadcast %28 : vector<1x128xi1> to vector<32x128xi1>
    %30 = vector.broadcast %cst_10 : f32 to vector<32x128xf32>
    %31 = arith.select %29, %21, %30 : vector<32x128xi1>, vector<32x128xf32>
    %cst_11 = arith.constant dense<0x7F800000> : vector<32xf32>
    %32 = vector.multi_reduction <minimumf>, %31, %cst_11 [1] : vector<32x128xf32> to vector<32xf32>
    %33 = vector.shape_cast %32 : vector<32xf32> to vector<32x1xf32>
    %cst_12 = arith.constant dense<0x7F800000> : vector<128xf32>
    %34 = vector.multi_reduction <minimumf>, %31, %cst_12 [0] : vector<32x128xf32> to vector<128xf32>
    %35 = vector.shape_cast %34 : vector<128xf32> to vector<1x128xf32>
    %c0_i32_13 = arith.constant 0 : i32
    %36 = arith.cmpi eq, %arg1, %c0_i32_13 : i32
    %37 = arith.extui %36 : i1 to i32
    %c0_i32_14 = arith.constant 0 : i32
    %38 = arith.cmpi ne, %37, %c0_i32_14 : i32
    scf.if %38 {
      %c0_29 = arith.constant 0 : index
      %c0_30 = arith.constant 0 : index
      %61 = vector.load %arg5[%c0_29, %c0_30] : memref<32x1xf32, #tpu.memory_space<vmem>>, vector<32x1xf32>
      tpu.vector_store %arg5[%c0_29, %c0_30], %33 {strides = array<i32>} : memref<32x1xf32, #tpu.memory_space<vmem>>, vector<32x1xf32>,
    } else {
    }
    %c0_i32_15 = arith.constant 0 : i32
    %39 = arith.cmpi sgt, %arg1, %c0_i32_15 : i32
    %40 = arith.extui %39 : i1 to i32
    %c0_i32_16 = arith.constant 0 : i32
    %41 = arith.cmpi ne, %40, %c0_i32_16 : i32
    scf.if %41 {
      %c0_29 = arith.constant 0 : index
      %c0_30 = arith.constant 0 : index
      %61 = vector.load %arg5[%c0_29, %c0_30] : memref<32x1xf32, #tpu.memory_space<vmem>>, vector<32x1xf32>
      %62 = arith.minimumf %61, %33 : vector<32x1xf32>
      %c0_31 = arith.constant 0 : index
      %c0_32 = arith.constant 0 : index
      %63 = vector.load %arg5[%c0_31, %c0_32] : memref<32x1xf32, #tpu.memory_space<vmem>>, vector<32x1xf32>
      tpu.vector_store %arg5[%c0_31, %c0_32], %62 {strides = array<i32>} : memref<32x1xf32, #tpu.memory_space<vmem>>, vector<32x1xf32>,
    } else {
    }
    %c128_i32_17 = arith.constant 128 : i32
    %42 = arith.muli %arg1, %c128_i32_17 : i32
    %43 = tpu.assume_multiple %42, 128 : i32
    %c0_i32_18 = arith.constant 0 : i32
    %44 = arith.cmpi eq, %arg0, %c0_i32_18 : i32
    %45 = arith.extui %44 : i1 to i32
    %c0_i32_19 = arith.constant 0 : i32
    %46 = arith.cmpi ne, %45, %c0_i32_19 : i32
    scf.if %46 {
      %c0_29 = arith.constant 0 : index
      %61 = arith.index_cast %43 : i32 to index
      %62 = vector.load %arg6[%c0_29, %61] : memref<1x128xf32, #tpu.memory_space<vmem>>, vector<1x128xf32>
      tpu.vector_store %arg6[%c0_29, %61], %35 {strides = array<i32>} : memref<1x128xf32, #tpu.memory_space<vmem>>, vector<1x128xf32>,
    } else {
    }
    %c0_i32_20 = arith.constant 0 : i32
    %47 = arith.cmpi sgt, %arg0, %c0_i32_20 : i32
    %48 = arith.extui %47 : i1 to i32
    %c0_i32_21 = arith.constant 0 : i32
    %49 = arith.cmpi ne, %48, %c0_i32_21 : i32
    scf.if %49 {
      %c0_29 = arith.constant 0 : index
      %61 = arith.index_cast %43 : i32 to index
      %62 = vector.load %arg6[%c0_29, %61] : memref<1x128xf32, #tpu.memory_space<vmem>>, vector<1x128xf32>
      %63 = arith.minimumf %62, %35 : vector<1x128xf32>
      %c0_30 = arith.constant 0 : index
      %64 = arith.index_cast %43 : i32 to index
      %65 = vector.load %arg6[%c0_30, %64] : memref<1x128xf32, #tpu.memory_space<vmem>>, vector<1x128xf32>
      tpu.vector_store %arg6[%c0_30, %64], %63 {strides = array<i32>} : memref<1x128xf32, #tpu.memory_space<vmem>>, vector<1x128xf32>,
    } else {
    }
    %c0_i32_22 = arith.constant 0 : i32
    %50 = arith.cmpi eq, %arg1, %c0_i32_22 : i32
    %51 = arith.extui %50 : i1 to i32
    %c0_i32_23 = arith.constant 0 : i32
    %52 = arith.cmpi ne, %51, %c0_i32_23 : i32
    scf.if %52 {
      %c0_29 = arith.constant 0 : index
      %c0_30 = arith.constant 0 : index
      %61 = vector.load %arg5[%c0_29, %c0_30] : memref<32x1xf32, #tpu.memory_space<vmem>>, vector<32x1xf32>
      %62 = math.sqrt %61 : vector<32x1xf32>
      %c0_31 = arith.constant 0 : index
      %c0_32 = arith.constant 0 : index
      %63 = vector.load %arg7[%c0_31, %c0_32] : memref<1x1xf32, #tpu.memory_space<vmem>>, vector<1x1xf32>
      %64 = vector.shape_cast %62 : vector<32x1xf32> to vector<1x32x1xf32>
      %cst_33 = arith.constant dense<0.000000e+00> : vector<1xf32>
      %65 = vector.multi_reduction <add>, %64, %cst_33 [1, 2] : vector<1x32x1xf32> to vector<1xf32>
      %66 = vector.shape_cast %65 : vector<1xf32> to vector<1x1x1xf32>
      %67 = vector.extract %66[0, 0, 0] : f32 from vector<1x1x1xf32>
      %68 = vector.broadcast %67 : f32 to vector<1x1xf32>
      %69 = arith.addf %63, %68 : vector<1x1xf32>
      %c0_34 = arith.constant 0 : index
      %c0_35 = arith.constant 0 : index
      %70 = vector.load %arg7[%c0_34, %c0_35] : memref<1x1xf32, #tpu.memory_space<vmem>>, vector<1x1xf32>
      tpu.vector_store %arg7[%c0_34, %c0_35], %69 {strides = array<i32>} : memref<1x1xf32, #tpu.memory_space<vmem>>, vector<1x1xf32>,
    } else {
    }
    %c0_i32_24 = arith.constant 0 : i32
    %53 = arith.cmpi eq, %arg0, %c0_i32_24 : i32
    %54 = arith.extui %53 : i1 to i32
    %c0_i32_25 = arith.constant 0 : i32
    %55 = arith.cmpi ne, %54, %c0_i32_25 : i32
    scf.if %55 {
      %c0_29 = arith.constant 0 : index
      %61 = arith.index_cast %43 : i32 to index
      %62 = vector.load %arg6[%c0_29, %61] : memref<1x128xf32, #tpu.memory_space<vmem>>, vector<1x128xf32>
      %63 = math.sqrt %62 : vector<1x128xf32>
      %cst_30 = arith.constant 0.000000e+00 : f32
      %64 = vector.broadcast %cst_30 : f32 to vector<1x128xf32>
      %65 = arith.select %27, %63, %64 : vector<1x128xi1>, vector<1x128xf32>
      %c0_31 = arith.constant 0 : index
      %c0_32 = arith.constant 0 : index
      %66 = vector.load %arg8[%c0_31, %c0_32] : memref<1x1xf32, #tpu.memory_space<vmem>>, vector<1x1xf32>
      %67 = vector.shape_cast %65 : vector<1x128xf32> to vector<1x1x128xf32>
      %cst_33 = arith.constant dense<0.000000e+00> : vector<1xf32>
      %68 = vector.multi_reduction <add>, %67, %cst_33 [1, 2] : vector<1x1x128xf32> to vector<1xf32>
      %69 = vector.shape_cast %68 : vector<1xf32> to vector<1x1x1xf32>
      %70 = vector.extract %69[0, 0, 0] : f32 from vector<1x1x1xf32>
      %71 = vector.broadcast %70 : f32 to vector<1x1xf32>
      %72 = arith.addf %66, %71 : vector<1x1xf32>
      %c0_34 = arith.constant 0 : index
      %c0_35 = arith.constant 0 : index
      %73 = vector.load %arg8[%c0_34, %c0_35] : memref<1x1xf32, #tpu.memory_space<vmem>>, vector<1x1xf32>
      tpu.vector_store %arg8[%c0_34, %c0_35], %72 {strides = array<i32>} : memref<1x1xf32, #tpu.memory_space<vmem>>, vector<1x1xf32>,
    } else {
    }
    %c0_i32_26 = arith.constant 0 : i32
    %56 = arith.cmpi eq, %arg0, %c0_i32_26 : i32
    %c0_i32_27 = arith.constant 0 : i32
    %57 = arith.cmpi eq, %arg1, %c0_i32_27 : i32
    %58 = arith.andi %56, %57 : i1
    %59 = arith.extui %58 : i1 to i32
    %c0_i32_28 = arith.constant 0 : i32
    %60 = arith.cmpi ne, %59, %c0_i32_28 : i32
    scf.if %60 {
      %c0_29 = arith.constant 0 : index
      %c0_30 = arith.constant 0 : index
      %61 = vector.load %arg7[%c0_29, %c0_30] : memref<1x1xf32, #tpu.memory_space<vmem>>, vector<1x1xf32>
      %cst_31 = arith.constant 3.125000e-02 : f32
      %62 = vector.broadcast %cst_31 : f32 to vector<1x1xf32>
      %63 = arith.mulf %61, %62 : vector<1x1xf32>
      %c0_32 = arith.constant 0 : index
      %c0_33 = arith.constant 0 : index
      %64 = vector.load %arg8[%c0_32, %c0_33] : memref<1x1xf32, #tpu.memory_space<vmem>>, vector<1x1xf32>
      %cst_34 = arith.constant 0.020833334 : f32
      %65 = vector.broadcast %cst_34 : f32 to vector<1x1xf32>
      %66 = arith.mulf %64, %65 : vector<1x1xf32>
      %67 = arith.addf %63, %66 : vector<1x1xf32>
      %c0_35 = arith.constant 0 : index
      %c0_36 = arith.constant 0 : index
      %68 = vector.load %arg4[%c0_35, %c0_36] : memref<1x1xf32, #tpu.memory_space<vmem>>, vector<1x1xf32>
      tpu.vector_store %arg4[%c0_35, %c0_36], %67 {strides = array<i32>} : memref<1x1xf32, #tpu.memory_space<vmem>>, vector<1x1xf32>,
    } else {
    }
    return
  }
  func.func @transform_0(%arg0: i32, %arg1: i32) -> (i32, i32) {
    %c0_i32 = arith.constant 0 : i32
    %c0_i32_0 = arith.constant 0 : i32
    return %arg0, %c0_i32 : i32, i32
  }
  func.func @transform_1(%arg0: i32, %arg1: i32) -> (i32, i32) {
    %c0_i32 = arith.constant 0 : i32
    %c0_i32_0 = arith.constant 0 : i32
    return %arg1, %c0_i32 : i32, i32
  }
  func.func @transform_2(%arg0: i32, %arg1: i32) -> (i32, i32) {
    %c0_i32 = arith.constant 0 : i32
    %c0_i32_0 = arith.constant 0 : i32
    %c0_i32_1 = arith.constant 0 : i32
    return %c0_i32, %c0_i32_0 : i32, i32
  }
}

</mosaic_0001>

<llo_original>
// kernel: tpu_custom_call.1
$region0: #{tpu_custom_call.1}
  #allocation0 [shape = 'u32[]', space=smem, size = 0x4, offset = 0x4, fixed_abs, tag = 'smem constant byte address 0x4 - core index']
  #allocation1 [shape = 'u32[144,128]{1,0:T(1,128)}', space=vmem, size = 0x12000, scoped, tag = 'internal scratch']
  #allocation2 [shape = 'f32[32,1]{1,0:T(8,128)}', space=vmem, size = 0x4000, scoped, tag = 'scratch operand']
  #allocation3 [shape = 'f32[1,128]{1,0:T(1,128)}', space=vmem, size = 0x200, scoped, tag = 'scratch operand']
  #allocation4 [shape = 'f32[1,1]{1,0:T(1,128)}', space=vmem, size = 0x200, scoped, tag = 'scratch operand']
  #allocation5 [shape = 'f32[1,1]{1,0:T(1,128)}', space=vmem, size = 0x200, scoped, tag = 'scratch operand']
  %s0 = inlined_call_operand.vmem [shape: f32[32,8], index: 0, kind: input, shape index: {}]
  %s1 = inlined_call_operand.vmem [shape: f32[128,8], index: 1, kind: input, shape index: {}]
  %s2 = inlined_call_operand.hbm [shape: f32[1,1], index: 2, kind: output, shape index: {}]
  %s3 = sld [smem:[#allocation0]]
  $region50: #{tpu_custom_call.1} parent=0
    _
  %s5 = ssub.s32 1, %s3
  %s6 = scalar_select 0, %s5, %s3
  $region1: #{tpu_custom_call.1} parent=0
    #allocation6 [shape = 'u8[512]{0}', space=vmem, size = 0x400, scoped, tag = 'output window, operand 0, single buffered']
    #allocation7 [shape = 's32[1]{0}', space=sflag, size = 0x4, scoped, tag = 'scoped memory for tpu_custom_call.1']
    %7 = vsyncpa [#allocation7], 0
    // Predicated region
    $region2: #{tpu_custom_call.1} parent=1 // pred_check
      _
    $region3: #{tpu_custom_call.1} parent=1 // pred_check_branch
      %9 = sbr.rel (0) target = $region5
    $region4: #{tpu_custom_call.1} parent=1 // pred_region
      _
    $region5: #{tpu_custom_call.1} parent=1 // pred_fallthru
      _
    // Predicated region
    $region6: #{tpu_custom_call.1} parent=1 // pred_check
      _
    $region7: #{tpu_custom_call.1} parent=1 // pred_check_branch
      %11 = sbr.rel (0) target = $region9
    $region8: #{tpu_custom_call.1} parent=1 // pred_region
      _
    $region9: #{tpu_custom_call.1} parent=1 // pred_fallthru
      _
    %p12 = scmp.eq.s32.totalorder 0, 0
    %p13 = scmp.eq.s32.totalorder 0, 0
    %p14 = pnand %p12, %p13
    %p15 = pneg %p14
    // Predicated region
    $region10: #{tpu_custom_call.1} parent=1 // pred_check
      _
    $region11: #{tpu_custom_call.1} parent=1 // pred_check_branch
      %17 = sbr.rel (%p14) target = $region13
    $region12: #{tpu_custom_call.1} parent=1 // pred_region
      %vm18 = vcmask 0
      %19 = vst.msk [vmem:[#allocation4] sm:$0x1] %vm18, 0.0
      %20 = vst.msk [vmem:[#allocation5] sm:$0x1] %vm18, 0.0
    $region13: #{tpu_custom_call.1} parent=1 // pred_fallthru
      _
    %v21 = vld [vmem:[%s0] sm:$0xff]
    %v22 = vld [vmem:[%s0 + $0x8] sm:$0xff]
    %v23 = vld [vmem:[%s0 + $0x10] sm:$0xff]
    %v24 = vld [vmem:[%s0 + $0x18] sm:$0xff]
    %v25 = vld [vmem:[%s1] sm:$0xff]
    %v26 = vld [vmem:[%s1 + $0x8] sm:$0xff]
    %v27 = vld [vmem:[%s1 + $0x10] sm:$0xff]
    %v28 = vld [vmem:[%s1 + $0x18] sm:$0xff]
    %v29 = vld [vmem:[%s1 + $0x20] sm:$0xff]
    %v30 = vld [vmem:[%s1 + $0x28] sm:$0xff]
    %v31 = vld [vmem:[%s1 + $0x30] sm:$0xff]
    %v32 = vld [vmem:[%s1 + $0x38] sm:$0xff]
    %v33 = vld [vmem:[%s1 + $0x40] sm:$0xff]
    %v34 = vld [vmem:[%s1 + $0x48] sm:$0xff]
    %v35 = vld [vmem:[%s1 + $0x50] sm:$0xff]
    %v36 = vld [vmem:[%s1 + $0x58] sm:$0xff]
    %v37 = vld [vmem:[%s1 + $0x60] sm:$0xff]
    %v38 = vld [vmem:[%s1 + $0x68] sm:$0xff]
    %v39 = vld [vmem:[%s1 + $0x70] sm:$0xff]
    %v40 = vld [vmem:[%s1 + $0x78] sm:$0xff]
    %v41 = vmul.f32 %v21, %v21
    %v42 = vmul.f32 %v22, %v22
    %v43 = vmul.f32 %v23, %v23
    %v44 = vmul.f32 %v24, %v24
    %vm45 = vcmask 64512
    %v46 = vsel %vm45, %v41, 0.0
    %47 = vadd.xlane.f32.xlu0 %v46
    %v48 = vpop.xlane.xlu0 %47
    %v49 = vsel %vm45, %v42, 0.0
    %50 = vadd.xlane.f32.xlu0 %v49
    %v51 = vpop.xlane.xlu0 %50
    %v52 = vsel %vm45, %v43, 0.0
    %53 = vadd.xlane.f32.xlu0 %v52
    %v54 = vpop.xlane.xlu0 %53
    %v55 = vsel %vm45, %v44, 0.0
    %56 = vadd.xlane.f32.xlu0 %v55
    %v57 = vpop.xlane.xlu0 %56
    %v58 = vmul.f32 %v25, %v25
    %v59 = vmul.f32 %v26, %v26
    %v60 = vmul.f32 %v27, %v27
    %v61 = vmul.f32 %v28, %v28
    %v62 = vmul.f32 %v29, %v29
    %v63 = vmul.f32 %v30, %v30
    %v64 = vmul.f32 %v31, %v31
    %v65 = vmul.f32 %v32, %v32
    %v66 = vmul.f32 %v33, %v33
    %v67 = vmul.f32 %v34, %v34
    %v68 = vmul.f32 %v35, %v35
    %v69 = vmul.f32 %v36, %v36
    %v70 = vmul.f32 %v37, %v37
    %v71 = vmul.f32 %v38, %v38
    %v72 = vmul.f32 %v39, %v39
    %v73 = vmul.f32 %v40, %v40
    %v75 = vsel %vm45, 1.0, 0
    %v78 = vsel %vm45, %v58, 0
    %v81 = vsel %vm45, %v59, 0
    %v84 = vsel %vm45, %v60, 0
    %v87 = vsel %vm45, %v61, 0
    %v90 = vsel %vm45, %v62, 0
    %v93 = vsel %vm45, %v63, 0
    %v96 = vsel %vm45, %v64, 0
    %v99 = vsel %vm45, %v65, 0
    %v102 = vsel %vm45, %v66, 0
    %v105 = vsel %vm45, %v67, 0
    %v108 = vsel %vm45, %v68, 0
    %v111 = vsel %vm45, %v69, 0
    %v114 = vsel %vm45, %v70, 0
    %v117 = vsel %vm45, %v71, 0
    %v120 = vsel %vm45, %v72, 0
    %v123 = vsel %vm45, %v73, 0
    %125 = vmatprep.subr.mxu0 0.0
    %126 = vmatpush1.xpose.msra.mxu0 %v78
    %127 = vmatprep.subr.mxu0 0.0
    %128 = vmatpush1.xpose.msra.mxu0 %v81
    %129 = vmatprep.subr.mxu0 0.0
    %130 = vmatpush1.xpose.msra.mxu0 %v84
    %131 = vmatprep.subr.mxu0 0.0
    %132 = vmatpush1.xpose.msra.mxu0 %v87
    %133 = vmatprep.subr.mxu0 0.0
    %134 = vmatpush1.xpose.msra.mxu0 %v90
    %135 = vmatprep.subr.mxu0 0.0
    %136 = vmatpush1.xpose.msra.mxu0 %v93
    %137 = vmatprep.subr.mxu0 0.0
    %138 = vmatpush1.xpose.msra.mxu0 %v96
    %139 = vmatprep.subr.mxu0 0.0
    %140 = vmatpush1.xpose.msra.mxu0 %v99
    %141 = vmatprep.subr.mxu0 0.0
    %142 = vmatpush1.xpose.msra.mxu0 %v102
    %143 = vmatprep.subr.mxu0 0.0
    %144 = vmatpush1.xpose.msra.mxu0 %v105
    %145 = vmatprep.subr.mxu0 0.0
    %146 = vmatpush1.xpose.msra.mxu0 %v108
    %147 = vmatprep.subr.mxu0 0.0
    %148 = vmatpush1.xpose.msra.mxu0 %v111
    %149 = vmatprep.subr.mxu0 0.0
    %150 = vmatpush1.xpose.msra.mxu0 %v114
    %151 = vmatprep.subr.mxu0 0.0
    %152 = vmatpush1.xpose.msra.mxu0 %v117
    %153 = vmatprep.subr.mxu0 0.0
    %154 = vmatpush1.xpose.msra.mxu0 %v120
    %155 = vmatprep.subr.mxu0 0.0
    %156 = vmatpush1.xpose.msra.mxu0 %v123
    %157 = vmatprep.subr.mxu0 0.0
    %158 = vmatpush1.xpose.msra.mxu0 0.0
    %159 = vmatprep.subr.mxu0 0.0
    %160 = vmatpush1.xpose.msra.mxu0 0.0
    %161 = vmatprep.subr.mxu0 0.0
    %162 = vmatpush1.xpose.msra.mxu0 0.0
    %163 = vmatprep.subr.mxu0 0.0
    %164 = vmatpush1.xpose.msra.mxu0 0.0
    %165 = vmatprep.subr.mxu0 0.0
    %166 = vmatpush1.xpose.msra.mxu0 0.0
    %167 = vmatprep.subr.mxu0 0.0
    %168 = vmatpush1.xpose.msra.mxu0 0.0
    %169 = vmatprep.subr.mxu0 0.0
    %170 = vmatpush1.xpose.msra.mxu0 0.0
    %171 = vmatprep.subr.mxu0 0.0
    %172 = vmatpush1.xpose.msra.mxu0 0.0
    %173 = vmatprep.subr.mxu0 0.0
    %174 = vmatpush1.xpose.msra.mxu0 0.0
    %175 = vmatprep.subr.mxu0 0.0
    %176 = vmatpush1.xpose.msra.mxu0 0.0
    %177 = vmatprep.subr.mxu0 0.0
    %178 = vmatpush1.xpose.msra.mxu0 0.0
    %179 = vmatprep.subr.mxu0 0.0
    %180 = vmatpush1.xpose.msra.mxu0 0.0
    %181 = vmatprep.subr.mxu0 0.0
    %182 = vmatpush1.xpose.msra.mxu0 0.0
    %183 = vmatprep.subr.mxu0 0.0
    %184 = vmatpush1.xpose.msra.mxu0 0.0
    %185 = vmatprep.subr.mxu0 0.0
    %186 = vmatpush1.xpose.msra.mxu0 0.0
    %187 = vmatprep.subr.mxu0 0.0
    %188 = vmatpush1.xpose.msra.mxu0 0.0
    %189 = vmatprep.mubr.f32.mxu0 0.0
    %190 = vmatmul.mubr.f32.gmra.mrb[0].mxu0 %v75
    %v191 = vpop.f32.mrb[0].mxu0
    %v192 = vadd.f32 0.0, %v191
    %v193 = vpop.f32.mrb[0].mxu0
    %194 = vdwg.mxu0
    %v196 = vsel %vm45, %v21, 0
    %v199 = vsel %vm45, %v22, 0
    %v202 = vsel %vm45, %v23, 0
    %v205 = vsel %vm45, %v24, 0
    %v208 = vsel %vm45, %v25, 0
    %v211 = vsel %vm45, %v26, 0
    %v214 = vsel %vm45, %v27, 0
    %v217 = vsel %vm45, %v28, 0
    %v220 = vsel %vm45, %v29, 0
    %v223 = vsel %vm45, %v30, 0
    %v226 = vsel %vm45, %v31, 0
    %v229 = vsel %vm45, %v32, 0
    %v232 = vsel %vm45, %v33, 0
    %v235 = vsel %vm45, %v34, 0
    %v238 = vsel %vm45, %v35, 0
    %v241 = vsel %vm45, %v36, 0
    %v244 = vsel %vm45, %v37, 0
    %v247 = vsel %vm45, %v38, 0
    %v250 = vsel %vm45, %v39, 0
    %v253 = vsel %vm45, %v40, 0
    %255 = vmatprep.subr.mxu0 0.0
    %256 = vmatpush1.xpose.msra.mxu0 %v208
    %257 = vmatprep.subr.mxu0 0.0
    %258 = vmatpush1.xpose.msra.mxu0 %v211
    %259 = vmatprep.subr.mxu0 0.0
    %260 = vmatpush1.xpose.msra.mxu0 %v214
    %261 = vmatprep.subr.mxu0 0.0
    %262 = vmatpush1.xpose.msra.mxu0 %v217
    %263 = vmatprep.subr.mxu0 0.0
    %264 = vmatpush1.xpose.msra.mxu0 %v220
    %265 = vmatprep.subr.mxu0 0.0
    %266 = vmatpush1.xpose.msra.mxu0 %v223
    %267 = vmatprep.subr.mxu0 0.0
    %268 = vmatpush1.xpose.msra.mxu0 %v226
    %269 = vmatprep.subr.mxu0 0.0
    %270 = vmatpush1.xpose.msra.mxu0 %v229
    %271 = vmatprep.subr.mxu0 0.0
    %272 = vmatpush1.xpose.msra.mxu0 %v232
    %273 = vmatprep.subr.mxu0 0.0
    %274 = vmatpush1.xpose.msra.mxu0 %v235
    %275 = vmatprep.subr.mxu0 0.0
    %276 = vmatpush1.xpose.msra.mxu0 %v238
    %277 = vmatprep.subr.mxu0 0.0
    %278 = vmatpush1.xpose.msra.mxu0 %v241
    %279 = vmatprep.subr.mxu0 0.0
    %280 = vmatpush1.xpose.msra.mxu0 %v244
    %281 = vmatprep.subr.mxu0 0.0
    %282 = vmatpush1.xpose.msra.mxu0 %v247
    %283 = vmatprep.subr.mxu0 0.0
    %284 = vmatpush1.xpose.msra.mxu0 %v250
    %285 = vmatprep.subr.mxu0 0.0
    %286 = vmatpush1.xpose.msra.mxu0 %v253
    %287 = vmatprep.subr.mxu0 0.0
    %288 = vmatpush1.xpose.msra.mxu0 0.0
    %289 = vmatprep.subr.mxu0 0.0
    %290 = vmatpush1.xpose.msra.mxu0 0.0
    %291 = vmatprep.subr.mxu0 0.0
    %292 = vmatpush1.xpose.msra.mxu0 0.0
    %293 = vmatprep.subr.mxu0 0.0
    %294 = vmatpush1.xpose.msra.mxu0 0.0
    %295 = vmatprep.subr.mxu0 0.0
    %296 = vmatpush1.xpose.msra.mxu0 0.0
    %297 = vmatprep.subr.mxu0 0.0
    %298 = vmatpush1.xpose.msra.mxu0 0.0
    %299 = vmatprep.subr.mxu0 0.0
    %300 = vmatpush1.xpose.msra.mxu0 0.0
    %301 = vmatprep.subr.mxu0 0.0
    %302 = vmatpush1.xpose.msra.mxu0 0.0
    %303 = vmatprep.subr.mxu0 0.0
    %304 = vmatpush1.xpose.msra.mxu0 0.0
    %305 = vmatprep.subr.mxu0 0.0
    %306 = vmatpush1.xpose.msra.mxu0 0.0
    %307 = vmatprep.subr.mxu0 0.0
    %308 = vmatpush1.xpose.msra.mxu0 0.0
    %309 = vmatprep.subr.mxu0 0.0
    %310 = vmatpush1.xpose.msra.mxu0 0.0
    %311 = vmatprep.subr.mxu0 0.0
    %312 = vmatpush1.xpose.msra.mxu0 0.0
    %313 = vmatprep.subr.mxu0 0.0
    %314 = vmatpush1.xpose.msra.mxu0 0.0
    %315 = vmatprep.subr.mxu0 0.0
    %316 = vmatpush1.xpose.msra.mxu0 0.0
    %317 = vmatprep.subr.mxu0 0.0
    %318 = vmatpush1.xpose.msra.mxu0 0.0
    %319 = vmatprep.mubr.f32.mxu0 0.0
    %320 = vmatmul.mubr.f32.gmra.mrb[0].mxu0 %v196
    %v321 = vpop.f32.mrb[0].mxu0
    %v322 = vadd.f32 0.0, %v321
    %v323 = vpop.f32.mrb[0].mxu0
    %324 = vmatprep.mubr.f32.mxu0 0.0
    %325 = vmatmul.mubr.f32.gmra.mrb[0].mxu0 %v199
    %v326 = vpop.f32.mrb[0].mxu0
    %v327 = vadd.f32 0.0, %v326
    %v328 = vpop.f32.mrb[0].mxu0
    %329 = vmatprep.mubr.f32.mxu0 0.0
    %330 = vmatmul.mubr.f32.gmra.mrb[0].mxu0 %v202
    %v331 = vpop.f32.mrb[0].mxu0
    %v332 = vadd.f32 0.0, %v331
    %v333 = vpop.f32.mrb[0].mxu0
    %334 = vmatprep.mubr.f32.mxu0 0.0
    %335 = vmatmul.mubr.f32.gmra.mrb[0].mxu0 %v205
    %v336 = vpop.f32.mrb[0].mxu0
    %v337 = vadd.f32 0.0, %v336
    %v338 = vpop.f32.mrb[0].mxu0
    %339 = vdwg.mxu0
    %v340 = vlaneseq
    %v341 = vshrl.u32 %v340, 7
    %v342 = vsub.s32 0, %v341
    %v343 = vrot.slane %v192, %v342
    %v344 = vadd.f32 %v48, %v343
    %v345 = vadd.f32 %v51, %v343
    %v346 = vadd.f32 %v54, %v343
    %v347 = vadd.f32 %v57, %v343
    %v348 = vmul.f32 %v322, 2.0
    %v349 = vmul.f32 %v327, 2.0
    %v350 = vmul.f32 %v332, 2.0
    %v351 = vmul.f32 %v337, 2.0
    %v352 = vsub.f32 %v344, %v348
    %v353 = vsub.f32 %v345, %v349
    %v354 = vsub.f32 %v346, %v350
    %v355 = vsub.f32 %v347, %v351
    %v356 = vmax.f32 %v352, 0.0
    %v357 = vmax.f32 %v353, 0.0
    %v358 = vmax.f32 %v354, 0.0
    %v359 = vmax.f32 %v355, 0.0
    %s360 = smul.u32 0, 128
    %v361 = vlaneseq
    %v362 = vand.u32 %v361, 127
    %v363 = vstv %s360
    %v364 = vadd.s32 %v363, %v362
    %vm365 = vcmp.lt.s32.totalorder %v364, 48
    %v366 = vsel %vm365, 1, 0
    %vm367 = vcmp.eq.s32.totalorder %v366, 1
    %v368 = vsel %vm367, %v356, inf
    %v369 = vsel %vm367, %v357, inf
    %v370 = vsel %vm367, %v358, inf
    %v371 = vsel %vm367, %v359, inf
    %372 = vmin.xlane.f32.xlu0 %v368
    %v373 = vpop.xlane.xlu0 %372
    %374 = vmin.xlane.f32.xlu0 %v369
    %v375 = vpop.xlane.xlu0 %374
    %376 = vmin.xlane.f32.xlu0 %v370
    %v377 = vpop.xlane.xlu0 %376
    %378 = vmin.xlane.f32.xlu0 %v371
    %v379 = vpop.xlane.xlu0 %378
    %v380 = vmin.f32 %v368, %v369
    %v381 = vmin.f32 %v370, %v371
    %v382 = vmin.f32 %v380, %v381
    %v383 = vrot.slane %v382, 4
    %v384 = vmin.f32 %v382, %v383
    %v385 = vrot.slane %v384, 2
    %v386 = vmin.f32 %v384, %v385
    %v387 = vrot.slane %v386, 1
    %v388 = vmin.f32 %v386, %v387
    // Predicated region
    $region14: #{tpu_custom_call.1} parent=1 // pred_check
      %p389 = pneg %p13
    $region15: #{tpu_custom_call.1} parent=1 // pred_check_branch
      %391 = sbr.rel (%p389) target = $region17
    $region16: #{tpu_custom_call.1} parent=1 // pred_region
      %vm392 = vcmask 7168
      %393 = vst.msk [vmem:[#allocation2] sm:$0xff] %vm392, %v373
      %394 = vst.msk [vmem:[#allocation2 + $0x8] sm:$0xff] %vm392, %v375
      %395 = vst.msk [vmem:[#allocation2 + $0x10] sm:$0xff] %vm392, %v377
      %396 = vst.msk [vmem:[#allocation2 + $0x18] sm:$0xff] %vm392, %v379
    $region17: #{tpu_custom_call.1} parent=1 // pred_fallthru
      _
    %p397 = scmp.gt.s32.totalorder 0, 0
    // Predicated region
    $region18: #{tpu_custom_call.1} parent=1 // pred_check
      %p398 = pneg %p397
    $region19: #{tpu_custom_call.1} parent=1 // pred_check_branch
      %400 = sbr.rel (%p398) target = $region21
    $region20: #{tpu_custom_call.1} parent=1 // pred_region
      %v401 = vld [vmem:[#allocation2] sm:$0xff]
      %v402 = vld [vmem:[#allocation2 + $0x8] sm:$0xff]
      %v403 = vld [vmem:[#allocation2 + $0x10] sm:$0xff]
      %v404 = vld [vmem:[#allocation2 + $0x18] sm:$0xff]
      %v405 = vmin.f32 %v401, %v373
      %v406 = vmin.f32 %v402, %v375
      %v407 = vmin.f32 %v403, %v377
      %v408 = vmin.f32 %v404, %v379
      %vm409 = vcmask 7168
      %410 = vst.msk [vmem:[#allocation2] sm:$0xff] %vm409, %v405
      %411 = vst.msk [vmem:[#allocation2 + $0x8] sm:$0xff] %vm409, %v406
      %412 = vst.msk [vmem:[#allocation2 + $0x10] sm:$0xff] %vm409, %v407
      %413 = vst.msk [vmem:[#allocation2 + $0x18] sm:$0xff] %vm409, %v408
    $region21: #{tpu_custom_call.1} parent=1 // pred_fallthru
      _
    // Predicated region
    $region22: #{tpu_custom_call.1} parent=1 // pred_check
      %p414 = pneg %p12
    $region23: #{tpu_custom_call.1} parent=1 // pred_check_branch
      %416 = sbr.rel (%p414) target = $region25
    $region24: #{tpu_custom_call.1} parent=1 // pred_region
      %s417 = sshra.s32 %s360, 7
      %s418 = sand.u32 %s360, 127
      %s419 = scalar_lea.vmem [#allocation3], %s417
      %420 = vst [vmem:[%s419] sm:$0x1] %v388
    $region25: #{tpu_custom_call.1} parent=1 // pred_fallthru
      _
    %p421 = scmp.gt.s32.totalorder 0, 0
    // Predicated region
    $region26: #{tpu_custom_call.1} parent=1 // pred_check
      %p422 = pneg %p421
    $region27: #{tpu_custom_call.1} parent=1 // pred_check_branch
      %424 = sbr.rel (%p422) target = $region29
    $region28: #{tpu_custom_call.1} parent=1 // pred_region
      %s425 = sshra.s32 %s360, 7
      %s426 = sand.u32 %s360, 127
      %s427 = scalar_lea.vmem [#allocation3], %s425
      %v428 = vld [vmem:[%s427] sm:$0x1]
      %v429 = vmin.f32 %v428, %v388
      %430 = vst [vmem:[%s427] sm:$0x1] %v429
    $region29: #{tpu_custom_call.1} parent=1 // pred_fallthru
      _
    // Predicated region
    $region30: #{tpu_custom_call.1} parent=1 // pred_check
      %p431 = pneg %p13
    $region31: #{tpu_custom_call.1} parent=1 // pred_check_branch
      %433 = sbr.rel (%p431) target = $region33
    $region32: #{tpu_custom_call.1} parent=1 // pred_region
      %v434 = vld [vmem:[#allocation2] sm:$0xff]
      %v435 = vld [vmem:[#allocation2 + $0x8] sm:$0xff]
      %v436 = vld [vmem:[#allocation2 + $0x10] sm:$0xff]
      %v437 = vld [vmem:[#allocation2 + $0x18] sm:$0xff]
      %v438 = vrsqrt.pop %v434
      %v439 = vmul.f32 %v434, %v438
      %vm440 = vcmp.eq.f32.partialorder %v434, inf
      %v441 = vsel %vm440, %v434, %v439
      %vm442 = vcmp.eq.f32.partialorder %v434, 0.0
      %v443 = vand.u32 %v434, 2147483648
      %v444 = vsel %vm442, %v443, %v441
      %v445 = vrsqrt.pop %v435
      %v446 = vmul.f32 %v435, %v445
      %vm447 = vcmp.eq.f32.partialorder %v435, inf
      %v448 = vsel %vm447, %v435, %v446
      %vm449 = vcmp.eq.f32.partialorder %v435, 0.0
      %v450 = vand.u32 %v435, 2147483648
      %v451 = vsel %vm449, %v450, %v448
      %v452 = vrsqrt.pop %v436
      %v453 = vmul.f32 %v436, %v452
      %vm454 = vcmp.eq.f32.partialorder %v436, inf
      %v455 = vsel %vm454, %v436, %v453
      %vm456 = vcmp.eq.f32.partialorder %v436, 0.0
      %v457 = vand.u32 %v436, 2147483648
      %v458 = vsel %vm456, %v457, %v455
      %v459 = vrsqrt.pop %v437
      %v460 = vmul.f32 %v437, %v459
      %vm461 = vcmp.eq.f32.partialorder %v437, inf
      %v462 = vsel %vm461, %v437, %v460
      %vm463 = vcmp.eq.f32.partialorder %v437, 0.0
      %v464 = vand.u32 %v437, 2147483648
      %v465 = vsel %vm463, %v464, %v462
      %v466 = vld [vmem:[#allocation4] sm:$0x1]
      %vm467 = vcmask 7168
      %v468 = vsel %vm467, %v444, 0.0
      %v469 = vsel %vm467, %v451, 0.0
      %v470 = vadd.f32 %v468, %v469
      %v471 = vsel %vm467, %v458, 0.0
      %v472 = vadd.f32 %v470, %v471
      %v473 = vsel %vm467, %v465, 0.0
      %v474 = vadd.f32 %v472, %v473
      %475 = vadd.xlane.f32.xlu0 %v474
      %v476 = vpop.xlane.xlu0 %475
      %v477 = vrot.slane %v476, 4
      %v478 = vadd.f32 %v476, %v477
      %v479 = vrot.slane %v478, 2
      %v480 = vadd.f32 %v478, %v479
      %v481 = vrot.slane %v480, 1
      %v482 = vadd.f32 %v480, %v481
      %s483 = vtos %v482
      %v484 = vstv %s483
      %v485 = vadd.f32 %v466, %v484
      %vm486 = vcmask 0
      %487 = vst.msk [vmem:[#allocation4] sm:$0x1] %vm486, %v485
    $region33: #{tpu_custom_call.1} parent=1 // pred_fallthru
      _
    // Predicated region
    $region34: #{tpu_custom_call.1} parent=1 // pred_check
      %p488 = pneg %p12
    $region35: #{tpu_custom_call.1} parent=1 // pred_check_branch
      %490 = sbr.rel (%p488) target = $region37
    $region36: #{tpu_custom_call.1} parent=1 // pred_region
      %s491 = sshra.s32 %s360, 7
      %s492 = sand.u32 %s360, 127
      %s493 = scalar_lea.vmem [#allocation3], %s491
      %v494 = vld [vmem:[%s493] sm:$0x1]
      %v495 = vrsqrt.pop %v494
      %v496 = vmul.f32 %v494, %v495
      %vm497 = vcmp.eq.f32.partialorder %v494, inf
      %v498 = vsel %vm497, %v494, %v496
      %vm499 = vcmp.eq.f32.partialorder %v494, 0.0
      %v500 = vand.u32 %v494, 2147483648
      %v501 = vsel %vm499, %v500, %v498
      %v502 = vsel %vm365, %v501, 0.0
      %v503 = vld [vmem:[#allocation5] sm:$0x1]
      %vm504 = vcmask 1040384
      %v505 = vsel %vm504, %v502, 0.0
      %506 = vadd.xlane.f32.xlu0 %v505
      %v507 = vpop.xlane.xlu0 %506
      %v508 = vrot.slane %v507, 4
      %v509 = vadd.f32 %v507, %v508
      %v510 = vrot.slane %v509, 2
      %v511 = vadd.f32 %v509, %v510
      %v512 = vrot.slane %v511, 1
      %v513 = vadd.f32 %v511, %v512
      %s514 = vtos %v513
      %v515 = vstv %s514
      %v516 = vadd.f32 %v503, %v515
      %vm517 = vcmask 0
      %518 = vst.msk [vmem:[#allocation5] sm:$0x1] %vm517, %v516
    $region37: #{tpu_custom_call.1} parent=1 // pred_fallthru
      _
    // Predicated region
    $region38: #{tpu_custom_call.1} parent=1 // pred_check
      _
    $region39: #{tpu_custom_call.1} parent=1 // pred_check_branch
      %520 = sbr.rel (%p14) target = $region41
    $region40: #{tpu_custom_call.1} parent=1 // pred_region
      %v521 = vld [vmem:[#allocation4] sm:$0x1]
      %v522 = vmul.f32 %v521, 0.03125
      %v523 = vld [vmem:[#allocation5] sm:$0x1]
      %v524 = vmul.f32 %v523, 0.020833334
      %v525 = vadd.f32 %v522, %v524
      %vm526 = vcmask 0
      %527 = vst.msk [vmem:[#allocation6] sm:$0x1] %vm526, %v525
    $region41: #{tpu_custom_call.1} parent=1 // pred_fallthru
      _
    // Predicated region
    $region42: #{tpu_custom_call.1} parent=1 // pred_check
      _
    $region43: #{tpu_custom_call.1} parent=1 // pred_check_branch
      %529 = sbr.rel (0) target = $region45
    $region44: #{tpu_custom_call.1} parent=1 // pred_region
      %s531 = ssub.s32 16, 16
      %532 = vsyncadd [#allocation7], %s531
      %s534 = sshll.u32 [#allocation6], 4
      %s535 = int_to_ptr.vmem [resolvable:$true] %s534
      %537 = dma.vmem_to_hbm [thread:$0]  %s535, 16, %s2, [#allocation7]
    $region45: #{tpu_custom_call.1} parent=1 // pred_fallthru
      _
    // Predicated region
    $region46: #{tpu_custom_call.1} parent=1 // pred_check
      _
    $region47: #{tpu_custom_call.1} parent=1 // pred_check_branch
      %539 = sbr.rel (0) target = $region49
    $region48: #{tpu_custom_call.1} parent=1 // pred_region
      %540 = dma.done [#allocation7], 16
    $region49: #{tpu_custom_call.1} parent=1 // pred_fallthru
      _
    %541 = vsyncpa [#allocation7], 1

</llo_original>
